<compile_context>
chip_gen: v6e
topology: v6e:2x2x1
jax: 0.10.0
libtpu: 0.0.40
codegen_flags: <defaults>
</compile_context>

<pallas_src>
import functools
import math

import jax
import jax.numpy as jnp
import numpy as np
from jax.experimental import pallas as pl
from jax.experimental.pallas import tpu as pltpu

LANES = 128


def _round_up(v, m):
    return ((v + m - 1) // m) * m


def _mlp_kernel(x_ref,
                w0_ref, b0_ref,
                w1_ref, b1_ref,
                w2_ref, b2_ref,
                w3_ref, b3_ref,
                o_ref):
    """One grid step: (bm, pack*c_in) packed rows -> (bm, pack*c_out) packed outputs.

    Every Linear layer is a single MXU matmul against the block-diagonal
    kron(I_pack, W) weights, so each x-row packed into a lane group is transformed
    independently; ReLUs are plain VPU maximums.  Weights/biases have constant
    index_maps, so they are copied into VMEM once and stay resident across steps.
    """
    h = jnp.dot(x_ref[...], w0_ref[...], preferred_element_type=jnp.float32) + b0_ref[...]
    h = jnp.maximum(h, 0.0)
    h = jnp.dot(h, w1_ref[...], preferred_element_type=jnp.float32) + b1_ref[...]
    h = jnp.maximum(h, 0.0)
    h = jnp.dot(h, w2_ref[...], preferred_element_type=jnp.float32) + b2_ref[...]
    h = jnp.maximum(h, 0.0)
    out = jnp.dot(h, w3_ref[...], preferred_element_type=jnp.float32) + b3_ref[...]
    o_ref[...] = out.astype(o_ref.dtype)


def _pack_layer(w, b, pack, rows, cols):
    """Expand Linear params to row-packed block-diagonal form.

    w: (d_in, d_out), b: (d_out,).  Returns
      wb: (rows, cols) with kron(I_pack, w) in the top-left, zeros elsewhere,
      bb: (1, cols)  with b tiled `pack` times, zeros in the padding lanes.
    Zero padding keeps the padded hidden lanes at exactly 0 through bias-add and
    ReLU, so they never contribute to later layers.
    """
    wb = jnp.kron(jnp.eye(pack, dtype=w.dtype), w)
    wb = jnp.pad(wb, ((0, rows - wb.shape[0]), (0, cols - wb.shape[1])))
    bb = jnp.pad(jnp.tile(b, pack), (0, cols - pack * b.shape[0]))
    return wb, bb.reshape(1, cols)


@functools.partial(jax.jit, static_argnames=("block_rows",))
def classifier_forward(x, params, *, block_rows=2048):
    """x: (N, in_channels) float32; params: w* as (in, out), b* as (out,).

    Returns (N, out_channels), matching `classifier.forward`.
    """
    n, c_in = x.shape
    c_out = params["w3"].shape[1]
    assert params["w0"].shape[0] == c_in

    # Pack factor: smallest number of x-rows whose features fill whole 128-lane groups
    # (32 for in_channels=12 -> 384 lanes).  The (N, c_in) row-major input is then
    # reinterpreted as (N/pack, pack*c_in): a free contiguous reshape, no pad/transpose
    # HBM round trip (the previous version's dominant cost).
    pack = LANES // math.gcd(c_in, LANES)
    k_in = pack * c_in
    k_h1 = _round_up(pack * params["w0"].shape[1], LANES)
    k_h2 = _round_up(pack * params["w1"].shape[1], LANES)
    k_h3 = _round_up(pack * params["w2"].shape[1], LANES)
    k_out = pack * c_out   # kept dense so the output reshape to (N, c_out) is free

    w0b, b0b = _pack_layer(params["w0"], params["b0"], pack, k_in, k_h1)
    w1b, b1b = _pack_layer(params["w1"], params["b1"], pack, k_h1, k_h2)
    w2b, b2b = _pack_layer(params["w2"], params["b2"], pack, k_h2, k_h3)
    w3b, b3b = _pack_layer(params["w3"], params["b3"], pack, k_h3, k_out)

    # Row padding only when N is not a multiple of `pack` (one small copy).
    # TODO(synk): producers that keep N % 32 == 0 (or keep x in the packed layout)
    # avoid this copy entirely.
    n_pad = _round_up(n, pack)
    if n_pad != n:
        x = jnp.pad(x, ((0, n_pad - n), (0, 0)))
    xp = x.reshape(n_pad // pack, k_in)
    r = n_pad // pack                     # number of packed rows

    # Block sizing: default 2048 packed rows = 64K x-rows = 3 MiB input block
    # (amortizes the ~0.35 us/step pipeline overhead), capped so the grid keeps >= 2
    # steps whenever possible (v7x megacore sharding) and never exceeds the array
    # (row block dim is either a multiple of 8 or the full dim).
    bm = max(8, min(block_rows, _round_up(pl.cdiv(r, 2), 8)))
    bm = min(bm, r)
    grid = (pl.cdiv(r, bm),)

    const = lambda i: (0, 0)              # weights/biases: fetched once, stay resident
    out_packed = pl.pallas_call(
        _mlp_kernel,
        out_shape=jax.ShapeDtypeStruct((r, k_out), x.dtype),
        grid_spec=pltpu.PrefetchScalarGridSpec(
            num_scalar_prefetch=0,
            grid=grid,
            in_specs=[
                pl.BlockSpec((bm, k_in), lambda i: (i, 0)),
                pl.BlockSpec(w0b.shape, const), pl.BlockSpec(b0b.shape, const),
                pl.BlockSpec(w1b.shape, const), pl.BlockSpec(b1b.shape, const),
                pl.BlockSpec(w2b.shape, const), pl.BlockSpec(b2b.shape, const),
                pl.BlockSpec(w3b.shape, const), pl.BlockSpec(b3b.shape, const),
            ],
            out_specs=pl.BlockSpec((bm, k_out), lambda i: (i, 0)),
        ),
        compiler_params=pltpu.CompilerParams(
            dimension_semantics=("parallel",),
            # ~10 MiB actually used at the default block size; 48 MiB leaves headroom
            # for larger block_rows while staying under v7x's 64 MiB physical VMEM.
            vmem_limit_bytes=48 * 1024 * 1024,
        ),
    )(xp, w0b, b0b, w1b, b1b, w2b, b2b, w3b, b3b)

    # Packed (N/pack, pack*c_out) row-major flattening IS the (N, c_out) result:
    # free reshape, no output transpose, no extra HBM pass.
    out = out_packed.reshape(n_pad, c_out)
    return out if n_pad == n else out[:n]


def init_params(key, in_channels=12, out_channels=1):
    """Deterministic init mimicking nn.Linear default (uniform +/- 1/sqrt(fan_in))."""
    dims = [(in_channels, 3), (3, 3), (3, 3), (3, out_channels)]
    params = {}
    for idx, (fin, fout) in enumerate(dims):
        key, kw, kb = jax.random.split(key, 3)
        bound = 1.0 / (fin ** 0.5)
        params[f"w{idx}"] = jax.random.uniform(
            kw, (fin, fout), jnp.float32, minval=-bound, maxval=bound)
        params[f"b{idx}"] = jax.random.uniform(
            kb, (fout,), jnp.float32, minval=-bound, maxval=bound)
    return params


def _reference_forward_np(x, params):
    """float64 numpy reference of the PyTorch forward pass."""
    x = np.asarray(x, np.float64)
    p = {k: np.asarray(v, np.float64) for k, v in params.items()}
    h = np.maximum(x @ p["w0"] + p["b0"], 0.0)
    h = np.maximum(h @ p["w1"] + p["b1"], 0.0)
    h = np.maximum(h @ p["w2"] + p["b2"], 0.0)
    return h @ p["w3"] + p["b3"]


if __name__ == "__main__":
    key = jax.random.PRNGKey(0)
    key, kx, kx2 = jax.random.split(key, 3)

    C_IN, C_OUT = 12, 1
    params = init_params(key, in_channels=C_IN, out_channels=C_OUT)

    # Aligned batch: zero-copy packed path, 2-step grid.
    N = 4096
    x = jax.random.normal(kx, (N, C_IN), dtype=jnp.float32)
    out = jax.block_until_ready(classifier_forward(x, params))
    ref = _reference_forward_np(x, params)
    assert out.shape == (N, C_OUT), out.shape
    # MXU default precision rounds matmul inputs to bf16 (f32 accumulate), same as
    # XLA's default for f32 dots on TPU -> tolerance sized for bf16-level error.
    np.testing.assert_allclose(np.asarray(out), ref, rtol=2e-2, atol=2e-2)

    # Unaligned batch: exercises the pad fallback (N % 32 != 0) and small-grid path.
    N2 = 100
    x2 = jax.random.normal(kx2, (N2, C_IN), dtype=jnp.float32)
    out2 = jax.block_until_ready(classifier_forward(x2, params))
    ref2 = _reference_forward_np(x2, params)
    assert out2.shape == (N2, C_OUT), out2.shape
    np.testing.assert_allclose(np.asarray(out2), ref2, rtol=2e-2, atol=2e-2)

    print("KERNEL_OK")
</pallas_src>

<mosaic_0001>
module attributes {stable_mosaic.version = 11 : i64} {
  func.func @_mlp_kernel(%arg0: i32, %arg1: memref<64x384xf32, #tpu.memory_space<vmem>>, %arg2: memref<384x128xf32, #tpu.memory_space<vmem>>, %arg3: memref<1x128xf32, #tpu.memory_space<vmem>>, %arg4: memref<128x128xf32, #tpu.memory_space<vmem>>, %arg5: memref<1x128xf32, #tpu.memory_space<vmem>>, %arg6: memref<128x128xf32, #tpu.memory_space<vmem>>, %arg7: memref<1x128xf32, #tpu.memory_space<vmem>>, %arg8: memref<128x32xf32, #tpu.memory_space<vmem>>, %arg9: memref<1x32xf32, #tpu.memory_space<vmem>>, %arg10: memref<64x32xf32, #tpu.memory_space<vmem>>) attributes {dimension_semantics = [#tpu.dimension_semantics<parallel>], iteration_bounds = array<i64: 2>, scalar_prefetch = 0 : i64, scratch_operands = 0 : i64, tpu.core_type = #tpu.core_type<tc>, window_params = [{transform_indices = @transform_0, window_bounds = array<i64: 64, 384>}, {pipeline_mode = #tpu.pipeline_mode<synchronous>, transform_indices = @transform_1, window_bounds = array<i64: 384, 128>}, {pipeline_mode = #tpu.pipeline_mode<synchronous>, transform_indices = @transform_2, window_bounds = array<i64: 1, 128>}, {pipeline_mode = #tpu.pipeline_mode<synchronous>, transform_indices = @transform_3, window_bounds = array<i64: 128, 128>}, {pipeline_mode = #tpu.pipeline_mode<synchronous>, transform_indices = @transform_4, window_bounds = array<i64: 1, 128>}, {pipeline_mode = #tpu.pipeline_mode<synchronous>, transform_indices = @transform_5, window_bounds = array<i64: 128, 128>}, {pipeline_mode = #tpu.pipeline_mode<synchronous>, transform_indices = @transform_6, window_bounds = array<i64: 1, 128>}, {pipeline_mode = #tpu.pipeline_mode<synchronous>, transform_indices = @transform_7, window_bounds = array<i64: 128, 32>}, {pipeline_mode = #tpu.pipeline_mode<synchronous>, transform_indices = @transform_8, window_bounds = array<i64: 1, 32>}, {transform_indices = @transform_9, window_bounds = array<i64: 64, 32>}]} {
    %c0 = arith.constant 0 : index
    %c0_0 = arith.constant 0 : index
    %0 = vector.load %arg1[%c0, %c0_0] : memref<64x384xf32, #tpu.memory_space<vmem>>, vector<64x384xf32>
    %c0_1 = arith.constant 0 : index
    %c0_2 = arith.constant 0 : index
    %1 = vector.load %arg2[%c0_1, %c0_2] : memref<384x128xf32, #tpu.memory_space<vmem>>, vector<384x128xf32>
    %cst = arith.constant dense<0.000000e+00> : vector<64x128xf32>
    %2 = tpu.matmul %0, %1, %cst {dimension_numbers = #tpu.dot_dimension_numbers<[1], [0], [0], [1], [0, 0, 1, 1], [], []>} : vector<64x384xf32>, vector<384x128xf32>, vector<64x128xf32> -> vector<64x128xf32>
    %c0_3 = arith.constant 0 : index
    %c0_4 = arith.constant 0 : index
    %3 = vector.load %arg3[%c0_3, %c0_4] : memref<1x128xf32, #tpu.memory_space<vmem>>, vector<1x128xf32>
    %4 = vector.broadcast %3 : vector<1x128xf32> to vector<64x128xf32>
    %5 = arith.addf %2, %4 : vector<64x128xf32>
    %cst_5 = arith.constant 0.000000e+00 : f32
    %6 = vector.broadcast %cst_5 : f32 to vector<64x128xf32>
    %7 = arith.maximumf %5, %6 : vector<64x128xf32>
    %c0_6 = arith.constant 0 : index
    %c0_7 = arith.constant 0 : index
    %8 = vector.load %arg4[%c0_6, %c0_7] : memref<128x128xf32, #tpu.memory_space<vmem>>, vector<128x128xf32>
    %cst_8 = arith.constant dense<0.000000e+00> : vector<64x128xf32>
    %9 = tpu.matmul %7, %8, %cst_8 {dimension_numbers = #tpu.dot_dimension_numbers<[1], [0], [0], [1], [0, 0, 1, 1], [], []>} : vector<64x128xf32>, vector<128x128xf32>, vector<64x128xf32> -> vector<64x128xf32>
    %c0_9 = arith.constant 0 : index
    %c0_10 = arith.constant 0 : index
    %10 = vector.load %arg5[%c0_9, %c0_10] : memref<1x128xf32, #tpu.memory_space<vmem>>, vector<1x128xf32>
    %11 = vector.broadcast %10 : vector<1x128xf32> to vector<64x128xf32>
    %12 = arith.addf %9, %11 : vector<64x128xf32>
    %cst_11 = arith.constant 0.000000e+00 : f32
    %13 = vector.broadcast %cst_11 : f32 to vector<64x128xf32>
    %14 = arith.maximumf %12, %13 : vector<64x128xf32>
    %c0_12 = arith.constant 0 : index
    %c0_13 = arith.constant 0 : index
    %15 = vector.load %arg6[%c0_12, %c0_13] : memref<128x128xf32, #tpu.memory_space<vmem>>, vector<128x128xf32>
    %cst_14 = arith.constant dense<0.000000e+00> : vector<64x128xf32>
    %16 = tpu.matmul %14, %15, %cst_14 {dimension_numbers = #tpu.dot_dimension_numbers<[1], [0], [0], [1], [0, 0, 1, 1], [], []>} : vector<64x128xf32>, vector<128x128xf32>, vector<64x128xf32> -> vector<64x128xf32>
    %c0_15 = arith.constant 0 : index
    %c0_16 = arith.constant 0 : index
    %17 = vector.load %arg7[%c0_15, %c0_16] : memref<1x128xf32, #tpu.memory_space<vmem>>, vector<1x128xf32>
    %18 = vector.broadcast %17 : vector<1x128xf32> to vector<64x128xf32>
    %19 = arith.addf %16, %18 : vector<64x128xf32>
    %cst_17 = arith.constant 0.000000e+00 : f32
    %20 = vector.broadcast %cst_17 : f32 to vector<64x128xf32>
    %21 = arith.maximumf %19, %20 : vector<64x128xf32>
    %c0_18 = arith.constant 0 : index
    %c0_19 = arith.constant 0 : index
    %22 = vector.load %arg8[%c0_18, %c0_19] : memref<128x32xf32, #tpu.memory_space<vmem>>, vector<128x32xf32>
    %cst_20 = arith.constant dense<0.000000e+00> : vector<64x32xf32>
    %23 = tpu.matmul %21, %22, %cst_20 {dimension_numbers = #tpu.dot_dimension_numbers<[1], [0], [0], [1], [0, 0, 1, 1], [], []>} : vector<64x128xf32>, vector<128x32xf32>, vector<64x32xf32> -> vector<64x32xf32>
    %c0_21 = arith.constant 0 : index
    %c0_22 = arith.constant 0 : index
    %24 = vector.load %arg9[%c0_21, %c0_22] : memref<1x32xf32, #tpu.memory_space<vmem>>, vector<1x32xf32>
    %25 = vector.broadcast %24 : vector<1x32xf32> to vector<64x32xf32>
    %26 = arith.addf %23, %25 : vector<64x32xf32>
    %c0_23 = arith.constant 0 : index
    %c0_24 = arith.constant 0 : index
    %27 = vector.load %arg10[%c0_23, %c0_24] : memref<64x32xf32, #tpu.memory_space<vmem>>, vector<64x32xf32>
    tpu.vector_store %arg10[%c0_23, %c0_24], %26 {strides = array<i32>} : memref<64x32xf32, #tpu.memory_space<vmem>>, vector<64x32xf32>,
    return
  }
  func.func @transform_0(%arg0: i32) -> (i32, i32) {
    %c0_i32 = arith.constant 0 : i32
    %c0_i32_0 = arith.constant 0 : i32
    return %arg0, %c0_i32 : i32, i32
  }
  func.func @transform_1(%arg0: i32) -> (i32, i32) {
    %c0_i32 = arith.constant 0 : i32
    %c0_i32_0 = arith.constant 0 : i32
    %c0_i32_1 = arith.constant 0 : i32
    return %c0_i32, %c0_i32_0 : i32, i32
  }
  func.func @transform_2(%arg0: i32) -> (i32, i32) {
    %c0_i32 = arith.constant 0 : i32
    %c0_i32_0 = arith.constant 0 : i32
    %c0_i32_1 = arith.constant 0 : i32
    return %c0_i32, %c0_i32_0 : i32, i32
  }
  func.func @transform_3(%arg0: i32) -> (i32, i32) {
    %c0_i32 = arith.constant 0 : i32
    %c0_i32_0 = arith.constant 0 : i32
    %c0_i32_1 = arith.constant 0 : i32
    return %c0_i32, %c0_i32_0 : i32, i32
  }
  func.func @transform_4(%arg0: i32) -> (i32, i32) {
    %c0_i32 = arith.constant 0 : i32
    %c0_i32_0 = arith.constant 0 : i32
    %c0_i32_1 = arith.constant 0 : i32
    return %c0_i32, %c0_i32_0 : i32, i32
  }
  func.func @transform_5(%arg0: i32) -> (i32, i32) {
    %c0_i32 = arith.constant 0 : i32
    %c0_i32_0 = arith.constant 0 : i32
    %c0_i32_1 = arith.constant 0 : i32
    return %c0_i32, %c0_i32_0 : i32, i32
  }
  func.func @transform_6(%arg0: i32) -> (i32, i32) {
    %c0_i32 = arith.constant 0 : i32
    %c0_i32_0 = arith.constant 0 : i32
    %c0_i32_1 = arith.constant 0 : i32
    return %c0_i32, %c0_i32_0 : i32, i32
  }
  func.func @transform_7(%arg0: i32) -> (i32, i32) {
    %c0_i32 = arith.constant 0 : i32
    %c0_i32_0 = arith.constant 0 : i32
    %c0_i32_1 = arith.constant 0 : i32
    return %c0_i32, %c0_i32_0 : i32, i32
  }
  func.func @transform_8(%arg0: i32) -> (i32, i32) {
    %c0_i32 = arith.constant 0 : i32
    %c0_i32_0 = arith.constant 0 : i32
    %c0_i32_1 = arith.constant 0 : i32
    return %c0_i32, %c0_i32_0 : i32, i32
  }
  func.func @transform_9(%arg0: i32) -> (i32, i32) {
    %c0_i32 = arith.constant 0 : i32
    %c0_i32_0 = arith.constant 0 : i32
    return %arg0, %c0_i32 : i32, i32
  }
}

</mosaic_0001>

<llo_original>
// kernel: classifier_forward.1
$region0: #{classifier_forward.1}
  #allocation0 [shape = 'u32[]', space=smem, size = 0x4, offset = 0x4, fixed_abs, tag = 'smem constant byte address 0x4 - core index']
  #allocation1 [shape = 'u32[144,128]{1,0:T(1,128)}', space=vmem, size = 0x12000, scoped, tag = 'internal scratch']
  %s0 = inlined_call_operand.vmem [shape: f32[128,384], index: 0, kind: input, shape index: {}]
  %s1 = inlined_call_operand.vmem [shape: f32[384,128], index: 1, kind: input, shape index: {}]
  %s2 = inlined_call_operand.vmem [shape: f32[1,128], index: 2, kind: input, shape index: {}]
  %s3 = inlined_call_operand.vmem [shape: f32[128,128], index: 3, kind: input, shape index: {}]
  %s4 = inlined_call_operand.vmem [shape: f32[1,128], index: 4, kind: input, shape index: {}]
  %s5 = inlined_call_operand.vmem [shape: f32[128,128], index: 5, kind: input, shape index: {}]
  %s6 = inlined_call_operand.vmem [shape: f32[1,128], index: 6, kind: input, shape index: {}]
  %s7 = inlined_call_operand.vmem [shape: f32[128,32], index: 7, kind: input, shape index: {}]
  %s8 = inlined_call_operand.vmem [shape: f32[1,32], index: 8, kind: input, shape index: {}]
  %s9 = inlined_call_operand.vmem [shape: f32[128,32], index: 9, kind: output, shape index: {}]
  %s10 = sld [smem:[#allocation0]]
  $region69: #{classifier_forward.1} parent=0
    _
  %s12 = ssub.s32 1, %s10
  %s13 = scalar_select 0, %s12, %s10
  loop: start=0, step=1, limit=4
  $region2: #{classifier_forward.1} parent=0 // loop_pre_header
    _
  $region3: #{classifier_forward.1} parent=0 // loop_header
    %s15 = sphi 0, %s19
    %p16 = scmp.ge.s32.totalorder %s15, 4
    %s25 = sphi 0, %s27
    %s28 = sphi 0, %s25
    %s29 = sphi 0, %s28
    %s45 = sphi 0, %s29
    %s49 = sphi 0, %s49
    %s51 = sphi 0, %s49
    %s52 = sphi 0, %s51
    %s66 = sphi 0, %s52
    %s70 = sphi 0, %s70
    %s72 = sphi 0, %s70
    %s73 = sphi 0, %s72
    %s87 = sphi 0, %s73
    %s91 = sphi 0, %s91
    %s93 = sphi 0, %s91
    %s94 = sphi 0, %s93
    %s108 = sphi 0, %s94
    %s112 = sphi 0, %s112
    %s114 = sphi 0, %s112
    %s115 = sphi 0, %s114
    %s129 = sphi 0, %s115
    %s133 = sphi 0, %s133
    %s135 = sphi 0, %s133
    %s136 = sphi 0, %s135
    %s150 = sphi 0, %s136
    %s154 = sphi 0, %s154
    %s156 = sphi 0, %s154
    %s157 = sphi 0, %s156
    %s171 = sphi 0, %s157
    %s175 = sphi 0, %s175
    %s177 = sphi 0, %s175
    %s178 = sphi 0, %s177
    %s192 = sphi 0, %s178
    %s196 = sphi 0, %s196
    %s198 = sphi 0, %s196
    %s199 = sphi 0, %s198
    %s213 = sphi 0, %s199
    %s219 = sphi 0, %s221
    %s222 = sphi 0, %s219
    %s223 = sphi 0, %s222
    %s239 = sphi 0, %s223
  $region4: #{classifier_forward.1} parent=0 // loop_header_branch
    %18 = sbr.rel (%p16) target = $region8
  $region5: #{classifier_forward.1} parent=0 // loop_body
    %s20 = ssub.s32 %s15, 1
    %s21 = ssub.s32 %s15, 2
    %s22 = sadd.s32 %s15, 1
    %s23 = ssub.s32 %s15, %s22
    %p24 = scmp.eq.s32.totalorder %s23, 0
    %s26 = sadd.s32 %s25, 1
    %s27 = scalar_select %p24, %s25, %s26
    %p30 = pneg %p24
    %p31 = scmp.eq.s32.totalorder %s15, 1
    %p32 = por %p30, %p31
    %p33 = scmp.ne.s32.totalorder %s25, %s28
    %p34 = scmp.eq.s32.totalorder %s15, 0
    %p35 = por %p33, %p34
    %p36 = scmp.ne.s32.totalorder %s25, %s28
    %p37 = scmp.eq.s32.totalorder %s20, 1
    %p38 = por %p36, %p37
    %p39 = scmp.ne.s32.totalorder %s28, %s29
    %p40 = scmp.eq.s32.totalorder %s20, 0
    %p41 = por %p39, %p40
    %p42 = scmp.ne.s32.totalorder %s28, %s29
    %p43 = scmp.eq.s32.totalorder %s21, 1
    %p44 = por %p42, %p43
    %p46 = scmp.ne.s32.totalorder %s29, %s45
    %p47 = scmp.eq.s32.totalorder %s21, 0
    %p48 = por %p46, %p47
    %s50 = sadd.s32 %s49, 1
    %p53 = scmp.eq.s32.totalorder %s15, 1
    %p54 = scmp.ne.s32.totalorder %s49, %s51
    %p55 = scmp.eq.s32.totalorder %s15, 0
    %p56 = por %p54, %p55
    %p57 = scmp.ne.s32.totalorder %s49, %s51
    %p58 = scmp.eq.s32.totalorder %s20, 1
    %p59 = por %p57, %p58
    %p60 = scmp.ne.s32.totalorder %s51, %s52
    %p61 = scmp.eq.s32.totalorder %s20, 0
    %p62 = por %p60, %p61
    %p63 = scmp.ne.s32.totalorder %s51, %s52
    %p64 = scmp.eq.s32.totalorder %s21, 1
    %p65 = por %p63, %p64
    %p67 = scmp.ne.s32.totalorder %s52, %s66
    %p68 = scmp.eq.s32.totalorder %s21, 0
    %p69 = por %p67, %p68
    %s71 = sadd.s32 %s70, 1
    %p74 = scmp.eq.s32.totalorder %s15, 1
    %p75 = scmp.ne.s32.totalorder %s70, %s72
    %p76 = scmp.eq.s32.totalorder %s15, 0
    %p77 = por %p75, %p76
    %p78 = scmp.ne.s32.totalorder %s70, %s72
    %p79 = scmp.eq.s32.totalorder %s20, 1
    %p80 = por %p78, %p79
    %p81 = scmp.ne.s32.totalorder %s72, %s73
    %p82 = scmp.eq.s32.totalorder %s20, 0
    %p83 = por %p81, %p82
    %p84 = scmp.ne.s32.totalorder %s72, %s73
    %p85 = scmp.eq.s32.totalorder %s21, 1
    %p86 = por %p84, %p85
    %p88 = scmp.ne.s32.totalorder %s73, %s87
    %p89 = scmp.eq.s32.totalorder %s21, 0
    %p90 = por %p88, %p89
    %s92 = sadd.s32 %s91, 1
    %p95 = scmp.eq.s32.totalorder %s15, 1
    %p96 = scmp.ne.s32.totalorder %s91, %s93
    %p97 = scmp.eq.s32.totalorder %s15, 0
    %p98 = por %p96, %p97
    %p99 = scmp.ne.s32.totalorder %s91, %s93
    %p100 = scmp.eq.s32.totalorder %s20, 1
    %p101 = por %p99, %p100
    %p102 = scmp.ne.s32.totalorder %s93, %s94
    %p103 = scmp.eq.s32.totalorder %s20, 0
    %p104 = por %p102, %p103
    %p105 = scmp.ne.s32.totalorder %s93, %s94
    %p106 = scmp.eq.s32.totalorder %s21, 1
    %p107 = por %p105, %p106
    %p109 = scmp.ne.s32.totalorder %s94, %s108
    %p110 = scmp.eq.s32.totalorder %s21, 0
    %p111 = por %p109, %p110
    %s113 = sadd.s32 %s112, 1
    %p116 = scmp.eq.s32.totalorder %s15, 1
    %p117 = scmp.ne.s32.totalorder %s112, %s114
    %p118 = scmp.eq.s32.totalorder %s15, 0
    %p119 = por %p117, %p118
    %p120 = scmp.ne.s32.totalorder %s112, %s114
    %p121 = scmp.eq.s32.totalorder %s20, 1
    %p122 = por %p120, %p121
    %p123 = scmp.ne.s32.totalorder %s114, %s115
    %p124 = scmp.eq.s32.totalorder %s20, 0
    %p125 = por %p123, %p124
    %p126 = scmp.ne.s32.totalorder %s114, %s115
    %p127 = scmp.eq.s32.totalorder %s21, 1
    %p128 = por %p126, %p127
    %p130 = scmp.ne.s32.totalorder %s115, %s129
    %p131 = scmp.eq.s32.totalorder %s21, 0
    %p132 = por %p130, %p131
    %s134 = sadd.s32 %s133, 1
    %p137 = scmp.eq.s32.totalorder %s15, 1
    %p138 = scmp.ne.s32.totalorder %s133, %s135
    %p139 = scmp.eq.s32.totalorder %s15, 0
    %p140 = por %p138, %p139
    %p141 = scmp.ne.s32.totalorder %s133, %s135
    %p142 = scmp.eq.s32.totalorder %s20, 1
    %p143 = por %p141, %p142
    %p144 = scmp.ne.s32.totalorder %s135, %s136
    %p145 = scmp.eq.s32.totalorder %s20, 0
    %p146 = por %p144, %p145
    %p147 = scmp.ne.s32.totalorder %s135, %s136
    %p148 = scmp.eq.s32.totalorder %s21, 1
    %p149 = por %p147, %p148
    %p151 = scmp.ne.s32.totalorder %s136, %s150
    %p152 = scmp.eq.s32.totalorder %s21, 0
    %p153 = por %p151, %p152
    %s155 = sadd.s32 %s154, 1
    %p158 = scmp.eq.s32.totalorder %s15, 1
    %p159 = scmp.ne.s32.totalorder %s154, %s156
    %p160 = scmp.eq.s32.totalorder %s15, 0
    %p161 = por %p159, %p160
    %p162 = scmp.ne.s32.totalorder %s154, %s156
    %p163 = scmp.eq.s32.totalorder %s20, 1
    %p164 = por %p162, %p163
    %p165 = scmp.ne.s32.totalorder %s156, %s157
    %p166 = scmp.eq.s32.totalorder %s20, 0
    %p167 = por %p165, %p166
    %p168 = scmp.ne.s32.totalorder %s156, %s157
    %p169 = scmp.eq.s32.totalorder %s21, 1
    %p170 = por %p168, %p169
    %p172 = scmp.ne.s32.totalorder %s157, %s171
    %p173 = scmp.eq.s32.totalorder %s21, 0
    %p174 = por %p172, %p173
    %s176 = sadd.s32 %s175, 1
    %p179 = scmp.eq.s32.totalorder %s15, 1
    %p180 = scmp.ne.s32.totalorder %s175, %s177
    %p181 = scmp.eq.s32.totalorder %s15, 0
    %p182 = por %p180, %p181
    %p183 = scmp.ne.s32.totalorder %s175, %s177
    %p184 = scmp.eq.s32.totalorder %s20, 1
    %p185 = por %p183, %p184
    %p186 = scmp.ne.s32.totalorder %s177, %s178
    %p187 = scmp.eq.s32.totalorder %s20, 0
    %p188 = por %p186, %p187
    %p189 = scmp.ne.s32.totalorder %s177, %s178
    %p190 = scmp.eq.s32.totalorder %s21, 1
    %p191 = por %p189, %p190
    %p193 = scmp.ne.s32.totalorder %s178, %s192
    %p194 = scmp.eq.s32.totalorder %s21, 0
    %p195 = por %p193, %p194
    %s197 = sadd.s32 %s196, 1
    %p200 = scmp.eq.s32.totalorder %s15, 1
    %p201 = scmp.ne.s32.totalorder %s196, %s198
    %p202 = scmp.eq.s32.totalorder %s15, 0
    %p203 = por %p201, %p202
    %p204 = scmp.ne.s32.totalorder %s196, %s198
    %p205 = scmp.eq.s32.totalorder %s20, 1
    %p206 = por %p204, %p205
    %p207 = scmp.ne.s32.totalorder %s198, %s199
    %p208 = scmp.eq.s32.totalorder %s20, 0
    %p209 = por %p207, %p208
    %p210 = scmp.ne.s32.totalorder %s198, %s199
    %p211 = scmp.eq.s32.totalorder %s21, 1
    %p212 = por %p210, %p211
    %p214 = scmp.ne.s32.totalorder %s199, %s213
    %p215 = scmp.eq.s32.totalorder %s21, 0
    %p216 = por %p214, %p215
    %s217 = ssub.s32 %s15, %s22
    %p218 = scmp.eq.s32.totalorder %s217, 0
    %s220 = sadd.s32 %s219, 1
    %s221 = scalar_select %p218, %s219, %s220
    %p224 = pneg %p218
    %p225 = scmp.eq.s32.totalorder %s15, 1
    %p226 = por %p224, %p225
    %p227 = scmp.ne.s32.totalorder %s219, %s222
    %p228 = scmp.eq.s32.totalorder %s15, 0
    %p229 = por %p227, %p228
    %p230 = scmp.ne.s32.totalorder %s219, %s222
    %p231 = scmp.eq.s32.totalorder %s20, 1
    %p232 = por %p230, %p231
    %p233 = scmp.ne.s32.totalorder %s222, %s223
    %p234 = scmp.eq.s32.totalorder %s20, 0
    %p235 = por %p233, %p234
    %p236 = scmp.ne.s32.totalorder %s222, %s223
    %p237 = scmp.eq.s32.totalorder %s21, 1
    %p238 = por %p236, %p237
    %p240 = scmp.ne.s32.totalorder %s223, %s239
    %p241 = scmp.eq.s32.totalorder %s21, 0
    %p242 = por %p240, %p241
    %p243 = scmp.le.s32.totalorder 1, %s15
    %p244 = scmp.lt.s32.totalorder %s15, 3
    %p245 = pnand %p243, %p244
    %p246 = pneg %p245
    // Predicated region
    $region9: #{classifier_forward.1} parent=5 // pred_check
      _
    $region10: #{classifier_forward.1} parent=5 // pred_check_branch
      %248 = sbr.rel (%p245) target = $region12
    $region11: #{classifier_forward.1} parent=5 // pred_region
      %s249 = ssub.s32 %s15, 1
      // Predicated region
      $region13: #{classifier_forward.1} parent=11 // pred_check
        %p250 = pneg %p62
      $region14: #{classifier_forward.1} parent=11 // pred_check_branch
        %252 = sbr.rel (%p250) target = $region16
      $region15: #{classifier_forward.1} parent=11 // pred_region
        _
      $region16: #{classifier_forward.1} parent=11 // pred_fallthru
        _
      // Predicated region
      $region17: #{classifier_forward.1} parent=11 // pred_check
        %p253 = pneg %p83
      $region18: #{classifier_forward.1} parent=11 // pred_check_branch
        %255 = sbr.rel (%p253) target = $region20
      $region19: #{classifier_forward.1} parent=11 // pred_region
        _
      $region20: #{classifier_forward.1} parent=11 // pred_fallthru
        _
      // Predicated region
      $region21: #{classifier_forward.1} parent=11 // pred_check
        %p256 = pneg %p104
      $region22: #{classifier_forward.1} parent=11 // pred_check_branch
        %258 = sbr.rel (%p256) target = $region24
      $region23: #{classifier_forward.1} parent=11 // pred_region
        _
      $region24: #{classifier_forward.1} parent=11 // pred_fallthru
        _
      // Predicated region
      $region25: #{classifier_forward.1} parent=11 // pred_check
        %p259 = pneg %p125
      $region26: #{classifier_forward.1} parent=11 // pred_check_branch
        %261 = sbr.rel (%p259) target = $region28
      $region27: #{classifier_forward.1} parent=11 // pred_region
        _
      $region28: #{classifier_forward.1} parent=11 // pred_fallthru
        _
      // Predicated region
      $region29: #{classifier_forward.1} parent=11 // pred_check
        %p262 = pneg %p146
      $region30: #{classifier_forward.1} parent=11 // pred_check_branch
        %264 = sbr.rel (%p262) target = $region32
      $region31: #{classifier_forward.1} parent=11 // pred_region
        _
      $region32: #{classifier_forward.1} parent=11 // pred_fallthru
        _
      // Predicated region
      $region33: #{classifier_forward.1} parent=11 // pred_check
        %p265 = pneg %p167
      $region34: #{classifier_forward.1} parent=11 // pred_check_branch
        %267 = sbr.rel (%p265) target = $region36
      $region35: #{classifier_forward.1} parent=11 // pred_region
        _
      $region36: #{classifier_forward.1} parent=11 // pred_fallthru
        _
      // Predicated region
      $region37: #{classifier_forward.1} parent=11 // pred_check
        %p268 = pneg %p188
      $region38: #{classifier_forward.1} parent=11 // pred_check_branch
        %270 = sbr.rel (%p268) target = $region40
      $region39: #{classifier_forward.1} parent=11 // pred_region
        _
      $region40: #{classifier_forward.1} parent=11 // pred_fallthru
        _
      // Predicated region
      $region41: #{classifier_forward.1} parent=11 // pred_check
        %p271 = pneg %p209
      $region42: #{classifier_forward.1} parent=11 // pred_check_branch
        %273 = sbr.rel (%p271) target = $region44
      $region43: #{classifier_forward.1} parent=11 // pred_region
        _
      $region44: #{classifier_forward.1} parent=11 // pred_fallthru
        _
    $region12: #{classifier_forward.1} parent=5 // pred_fallthru
      _
    %p274 = scmp.lt.s32.totalorder %s15, 2
    // Predicated region
    $region45: #{classifier_forward.1} parent=5 // pred_check
      %p275 = pneg %p274
    $region46: #{classifier_forward.1} parent=5 // pred_check_branch
      %277 = sbr.rel (%p275) target = $region48
    $region47: #{classifier_forward.1} parent=5 // pred_region
      // Predicated region
      $region49: #{classifier_forward.1} parent=47 // pred_check
        %p278 = pneg %p35
      $region50: #{classifier_forward.1} parent=47 // pred_check_branch
        %280 = sbr.rel (%p278) target = $region52
      $region51: #{classifier_forward.1} parent=47 // pred_region
        %s281 = smul.u32 8, %s15
        %p282 = scmp.lt.s32.totalorder %s281, 15
        %s283 = scalar_select %p282, %s281, 15
        %s284 = smul.addr %s283, 3
        %s285 = smul.addr %s284, 8
        %s286 = scalar_lea.vmem %s0, %s285
        %s287 = smul.u32 8, %s15
      $region52: #{classifier_forward.1} parent=47 // pred_fallthru
        _
    $region48: #{classifier_forward.1} parent=5 // pred_fallthru
      _
    %p288 = scmp.le.s32.totalorder 1, %s15
    %p289 = scmp.lt.s32.totalorder %s15, 3
    %p290 = pnand %p288, %p289
    %p291 = pneg %p290
    // Predicated region
    $region53: #{classifier_forward.1} parent=5 // pred_check
      _
    $region54: #{classifier_forward.1} parent=5 // pred_check_branch
      %293 = sbr.rel (%p290) target = $region56
    $region55: #{classifier_forward.1} parent=5 // pred_region
      %s294 = ssub.s32 %s15, 1
      %s295 = smul.u32 8, %s20
      %p296 = scmp.lt.s32.totalorder %s295, 15
      %s297 = scalar_select %p296, %s295, 15
      %s298 = smul.addr %s297, 3
      %s299 = smul.addr %s298, 8
      %s300 = scalar_lea.vmem %s0, %s299
      %p301 = pneg %p41
      %p302 = pneg %p38
      %p303 = pneg %p62
      %p304 = pneg %p59
      %p305 = pneg %p83
      %p306 = pneg %p80
      %p307 = pneg %p104
      %p308 = pneg %p101
      %p309 = pneg %p125
      %p310 = pneg %p122
      %p311 = pneg %p146
      %p312 = pneg %p143
      %p313 = pneg %p167
      %p314 = pneg %p164
      %p315 = pneg %p188
      %p316 = pneg %p185
      %p317 = pneg %p209
      %p318 = pneg %p206
      %p319 = pneg %p235
      %p320 = pneg %p232
      %s321 = smul.u32 8, %s20
      %p322 = scmp.lt.s32.totalorder %s321, 15
      %s323 = scalar_select %p322, %s321, 15
      %s324 = smul.addr %s323, 8
      %s325 = scalar_lea.vmem %s9, %s324
      %s326 = smul.u32 8, %s20
      %p327 = scmp.lt.s32.totalorder %s326, 15
      %s328 = scalar_select %p327, %s326, 15
      %s329 = smul.addr %s328, 3
      %s330 = smul.addr %s329, 8
      %s331 = scalar_lea.vmem %s0, %s330
      %s332 = smul.u32 8, %s20
      %s333 = smul.u32 8, %s20
      %p334 = scmp.lt.s32.totalorder %s333, 15
      %s335 = scalar_select %p334, %s333, 15
      %s336 = smul.addr %s335, 8
      %s337 = scalar_lea.vmem %s9, %s336
      %s338 = smul.u32 8, %s20
      %v339 = vld [vmem:[%s331] sm:$0xff]
      %v340 = vld [vmem:[%s331 + $0x8] sm:$0xff]
      %v341 = vld [vmem:[%s331 + $0x10] sm:$0xff]
      %v342 = vld [vmem:[%s331 + $0x18] sm:$0xff]
      %v343 = vld [vmem:[%s331 + $0x20] sm:$0xff]
      %v344 = vld [vmem:[%s331 + $0x28] sm:$0xff]
      %v345 = vld [vmem:[%s331 + $0x30] sm:$0xff]
      %v346 = vld [vmem:[%s331 + $0x38] sm:$0xff]
      %v347 = vld [vmem:[%s331 + $0x40] sm:$0xff]
      %v348 = vld [vmem:[%s331 + $0x48] sm:$0xff]
      %v349 = vld [vmem:[%s331 + $0x50] sm:$0xff]
      %v350 = vld [vmem:[%s331 + $0x58] sm:$0xff]
      %v351 = vld [vmem:[%s331 + $0x60] sm:$0xff]
      %v352 = vld [vmem:[%s331 + $0x68] sm:$0xff]
      %v353 = vld [vmem:[%s331 + $0x70] sm:$0xff]
      %v354 = vld [vmem:[%s331 + $0x78] sm:$0xff]
      %v355 = vld [vmem:[%s331 + $0x80] sm:$0xff]
      %v356 = vld [vmem:[%s331 + $0x88] sm:$0xff]
      %v357 = vld [vmem:[%s331 + $0x90] sm:$0xff]
      %v358 = vld [vmem:[%s331 + $0x98] sm:$0xff]
      %v359 = vld [vmem:[%s331 + $0xa0] sm:$0xff]
      %v360 = vld [vmem:[%s331 + $0xa8] sm:$0xff]
      %v361 = vld [vmem:[%s331 + $0xb0] sm:$0xff]
      %v362 = vld [vmem:[%s331 + $0xb8] sm:$0xff]
      %v363 = vld [vmem:[%s1] sm:$0xff]
      %v364 = vld [vmem:[%s1 + $0x8] sm:$0xff]
      %v365 = vld [vmem:[%s1 + $0x10] sm:$0xff]
      %v366 = vld [vmem:[%s1 + $0x18] sm:$0xff]
      %v367 = vld [vmem:[%s1 + $0x20] sm:$0xff]
      %v368 = vld [vmem:[%s1 + $0x28] sm:$0xff]
      %v369 = vld [vmem:[%s1 + $0x30] sm:$0xff]
      %v370 = vld [vmem:[%s1 + $0x38] sm:$0xff]
      %v371 = vld [vmem:[%s1 + $0x40] sm:$0xff]
      %v372 = vld [vmem:[%s1 + $0x48] sm:$0xff]
      %v373 = vld [vmem:[%s1 + $0x50] sm:$0xff]
      %v374 = vld [vmem:[%s1 + $0x58] sm:$0xff]
      %v375 = vld [vmem:[%s1 + $0x60] sm:$0xff]
      %v376 = vld [vmem:[%s1 + $0x68] sm:$0xff]
      %v377 = vld [vmem:[%s1 + $0x70] sm:$0xff]
      %v378 = vld [vmem:[%s1 + $0x78] sm:$0xff]
      %v379 = vld [vmem:[%s1 + $0x80] sm:$0xff]
      %v380 = vld [vmem:[%s1 + $0x88] sm:$0xff]
      %v381 = vld [vmem:[%s1 + $0x90] sm:$0xff]
      %v382 = vld [vmem:[%s1 + $0x98] sm:$0xff]
      %v383 = vld [vmem:[%s1 + $0xa0] sm:$0xff]
      %v384 = vld [vmem:[%s1 + $0xa8] sm:$0xff]
      %v385 = vld [vmem:[%s1 + $0xb0] sm:$0xff]
      %v386 = vld [vmem:[%s1 + $0xb8] sm:$0xff]
      %v387 = vld [vmem:[%s1 + $0xc0] sm:$0xff]
      %v388 = vld [vmem:[%s1 + $0xc8] sm:$0xff]
      %v389 = vld [vmem:[%s1 + $0xd0] sm:$0xff]
      %v390 = vld [vmem:[%s1 + $0xd8] sm:$0xff]
      %v391 = vld [vmem:[%s1 + $0xe0] sm:$0xff]
      %v392 = vld [vmem:[%s1 + $0xe8] sm:$0xff]
      %v393 = vld [vmem:[%s1 + $0xf0] sm:$0xff]
      %v394 = vld [vmem:[%s1 + $0xf8] sm:$0xff]
      %v395 = vld [vmem:[%s1 + $0x100] sm:$0xff]
      %v396 = vld [vmem:[%s1 + $0x108] sm:$0xff]
      %v397 = vld [vmem:[%s1 + $0x110] sm:$0xff]
      %v398 = vld [vmem:[%s1 + $0x118] sm:$0xff]
      %v399 = vld [vmem:[%s1 + $0x120] sm:$0xff]
      %v400 = vld [vmem:[%s1 + $0x128] sm:$0xff]
      %v401 = vld [vmem:[%s1 + $0x130] sm:$0xff]
      %v402 = vld [vmem:[%s1 + $0x138] sm:$0xff]
      %v403 = vld [vmem:[%s1 + $0x140] sm:$0xff]
      %v404 = vld [vmem:[%s1 + $0x148] sm:$0xff]
      %v405 = vld [vmem:[%s1 + $0x150] sm:$0xff]
      %v406 = vld [vmem:[%s1 + $0x158] sm:$0xff]
      %v407 = vld [vmem:[%s1 + $0x160] sm:$0xff]
      %v408 = vld [vmem:[%s1 + $0x168] sm:$0xff]
      %v409 = vld [vmem:[%s1 + $0x170] sm:$0xff]
      %v410 = vld [vmem:[%s1 + $0x178] sm:$0xff]
      %v411 = vld [vmem:[%s2] sm:$0x1]
      %v413 = vlaneseq
      %v414 = vshrl.u32 %v413, 7
      %v415 = vsub.s32 0, %v414
      %v416 = vrot.slane %v411, %v415
      %418 = vmatprep.subr.mxu0 0.0
      %419 = vmatpush1.msra.mxu0 %v378
      %420 = vmatprep.subr.mxu0 0.0
      %421 = vmatpush1.msra.mxu0 %v377
      %422 = vmatprep.subr.mxu0 0.0
      %423 = vmatpush1.msra.mxu0 %v376
      %424 = vmatprep.subr.mxu0 0.0
      %425 = vmatpush1.msra.mxu0 %v375
      %426 = vmatprep.subr.mxu0 0.0
      %427 = vmatpush1.msra.mxu0 %v374
      %428 = vmatprep.subr.mxu0 0.0
      %429 = vmatpush1.msra.mxu0 %v373
      %430 = vmatprep.subr.mxu0 0.0
      %431 = vmatpush1.msra.mxu0 %v372
      %432 = vmatprep.subr.mxu0 0.0
      %433 = vmatpush1.msra.mxu0 %v371
      %434 = vmatprep.subr.mxu0 0.0
      %435 = vmatpush1.msra.mxu0 %v370
      %436 = vmatprep.subr.mxu0 0.0
      %437 = vmatpush1.msra.mxu0 %v369
      %438 = vmatprep.subr.mxu0 0.0
      %439 = vmatpush1.msra.mxu0 %v368
      %440 = vmatprep.subr.mxu0 0.0
      %441 = vmatpush1.msra.mxu0 %v367
      %442 = vmatprep.subr.mxu0 0.0
      %443 = vmatpush1.msra.mxu0 %v366
      %444 = vmatprep.subr.mxu0 0.0
      %445 = vmatpush1.msra.mxu0 %v365
      %446 = vmatprep.subr.mxu0 0.0
      %447 = vmatpush1.msra.mxu0 %v364
      %448 = vmatprep.subr.mxu0 0.0
      %449 = vmatpush1.msra.mxu0 %v363
      %450 = vmatprep.subr.mxu0 0.0
      %451 = vmatpush2.msra.mxu0 %v394
      %452 = vmatprep.subr.mxu0 0.0
      %453 = vmatpush2.msra.mxu0 %v393
      %454 = vmatprep.subr.mxu0 0.0
      %455 = vmatpush2.msra.mxu0 %v392
      %456 = vmatprep.subr.mxu0 0.0
      %457 = vmatpush2.msra.mxu0 %v391
      %458 = vmatprep.subr.mxu0 0.0
      %459 = vmatpush2.msra.mxu0 %v390
      %460 = vmatprep.subr.mxu0 0.0
      %461 = vmatpush2.msra.mxu0 %v389
      %462 = vmatprep.subr.mxu0 0.0
      %463 = vmatpush2.msra.mxu0 %v388
      %464 = vmatprep.subr.mxu0 0.0
      %465 = vmatpush2.msra.mxu0 %v387
      %466 = vmatprep.subr.mxu0 0.0
      %467 = vmatpush2.msra.mxu0 %v386
      %468 = vmatprep.subr.mxu0 0.0
      %469 = vmatpush2.msra.mxu0 %v385
      %470 = vmatprep.subr.mxu0 0.0
      %471 = vmatpush2.msra.mxu0 %v384
      %472 = vmatprep.subr.mxu0 0.0
      %473 = vmatpush2.msra.mxu0 %v383
      %474 = vmatprep.subr.mxu0 0.0
      %475 = vmatpush2.msra.mxu0 %v382
      %476 = vmatprep.subr.mxu0 0.0
      %477 = vmatpush2.msra.mxu0 %v381
      %478 = vmatprep.subr.mxu0 0.0
      %479 = vmatpush2.msra.mxu0 %v380
      %480 = vmatprep.subr.mxu0 0.0
      %481 = vmatpush2.msra.mxu0 %v379
      %482 = vmatprep.mubr.f32.mxu0 %v340
      %483 = vmatmul.mubr.f32.gmra.mxu0 %v339
      %v484 = vpop.f32.mrf.mxu0
      %v485 = vadd.f32 %v416, %v484
      %v486 = vpop.f32.mrf.mxu0
      %487 = vmatprep.mubr.f32.mxu0 %v343
      %488 = vmatmul.mubr.f32.gmra.mxu0 %v342
      %v489 = vpop.f32.mrf.mxu0
      %v490 = vadd.f32 %v416, %v489
      %v491 = vpop.f32.mrf.mxu0
      %492 = vmatprep.mubr.f32.mxu0 %v346
      %493 = vmatmul.mubr.f32.gmra.mxu0 %v345
      %v494 = vpop.f32.mrf.mxu0
      %v495 = vadd.f32 %v416, %v494
      %v496 = vpop.f32.mrf.mxu0
      %497 = vmatprep.mubr.f32.mxu0 %v349
      %498 = vmatmul.mubr.f32.gmra.mxu0 %v348
      %v499 = vpop.f32.mrf.mxu0
      %v500 = vadd.f32 %v416, %v499
      %v501 = vpop.f32.mrf.mxu0
      %502 = vmatprep.mubr.f32.mxu0 %v352
      %503 = vmatmul.mubr.f32.gmra.mxu0 %v351
      %v504 = vpop.f32.mrf.mxu0
      %v505 = vadd.f32 %v416, %v504
      %v506 = vpop.f32.mrf.mxu0
      %507 = vmatprep.mubr.f32.mxu0 %v355
      %508 = vmatmul.mubr.f32.gmra.mxu0 %v354
      %v509 = vpop.f32.mrf.mxu0
      %v510 = vadd.f32 %v416, %v509
      %v511 = vpop.f32.mrf.mxu0
      %512 = vmatprep.mubr.f32.mxu0 %v358
      %513 = vmatmul.mubr.f32.gmra.mxu0 %v357
      %v514 = vpop.f32.mrf.mxu0
      %v515 = vadd.f32 %v416, %v514
      %v516 = vpop.f32.mrf.mxu0
      %517 = vmatprep.mubr.f32.mxu0 %v361
      %518 = vmatmul.mubr.f32.gmra.mxu0 %v360
      %v519 = vpop.f32.mrf.mxu0
      %v520 = vadd.f32 %v416, %v519
      %v521 = vpop.f32.mrf.mxu0
      %522 = vdwg.mxu0
      %523 = vmatprep.subr.mxu0 0.0
      %524 = vmatpush1.msra.mxu0 %v410
      %525 = vmatprep.subr.mxu0 0.0
      %526 = vmatpush1.msra.mxu0 %v409
      %527 = vmatprep.subr.mxu0 0.0
      %528 = vmatpush1.msra.mxu0 %v408
      %529 = vmatprep.subr.mxu0 0.0
      %530 = vmatpush1.msra.mxu0 %v407
      %531 = vmatprep.subr.mxu0 0.0
      %532 = vmatpush1.msra.mxu0 %v406
      %533 = vmatprep.subr.mxu0 0.0
      %534 = vmatpush1.msra.mxu0 %v405
      %535 = vmatprep.subr.mxu0 0.0
      %536 = vmatpush1.msra.mxu0 %v404
      %537 = vmatprep.subr.mxu0 0.0
      %538 = vmatpush1.msra.mxu0 %v403
      %539 = vmatprep.subr.mxu0 0.0
      %540 = vmatpush1.msra.mxu0 %v402
      %541 = vmatprep.subr.mxu0 0.0
      %542 = vmatpush1.msra.mxu0 %v401
      %543 = vmatprep.subr.mxu0 0.0
      %544 = vmatpush1.msra.mxu0 %v400
      %545 = vmatprep.subr.mxu0 0.0
      %546 = vmatpush1.msra.mxu0 %v399
      %547 = vmatprep.subr.mxu0 0.0
      %548 = vmatpush1.msra.mxu0 %v398
      %549 = vmatprep.subr.mxu0 0.0
      %550 = vmatpush1.msra.mxu0 %v397
      %551 = vmatprep.subr.mxu0 0.0
      %552 = vmatpush1.msra.mxu0 %v396
      %553 = vmatprep.subr.mxu0 0.0
      %554 = vmatpush1.msra.mxu0 %v395
      %555 = vmatprep.subr.mxu0 0.0
      %556 = vmatpush2.msra.mxu0 0.0
      %557 = vmatprep.subr.mxu0 0.0
      %558 = vmatpush2.msra.mxu0 0.0
      %559 = vmatprep.subr.mxu0 0.0
      %560 = vmatpush2.msra.mxu0 0.0
      %561 = vmatprep.subr.mxu0 0.0
      %562 = vmatpush2.msra.mxu0 0.0
      %563 = vmatprep.subr.mxu0 0.0
      %564 = vmatpush2.msra.mxu0 0.0
      %565 = vmatprep.subr.mxu0 0.0
      %566 = vmatpush2.msra.mxu0 0.0
      %567 = vmatprep.subr.mxu0 0.0
      %568 = vmatpush2.msra.mxu0 0.0
      %569 = vmatprep.subr.mxu0 0.0
      %570 = vmatpush2.msra.mxu0 0.0
      %571 = vmatprep.subr.mxu0 0.0
      %572 = vmatpush2.msra.mxu0 0.0
      %573 = vmatprep.subr.mxu0 0.0
      %574 = vmatpush2.msra.mxu0 0.0
      %575 = vmatprep.subr.mxu0 0.0
      %576 = vmatpush2.msra.mxu0 0.0
      %577 = vmatprep.subr.mxu0 0.0
      %578 = vmatpush2.msra.mxu0 0.0
      %579 = vmatprep.subr.mxu0 0.0
      %580 = vmatpush2.msra.mxu0 0.0
      %581 = vmatprep.subr.mxu0 0.0
      %582 = vmatpush2.msra.mxu0 0.0
      %583 = vmatprep.subr.mxu0 0.0
      %584 = vmatpush2.msra.mxu0 0.0
      %585 = vmatprep.subr.mxu0 0.0
      %586 = vmatpush2.msra.mxu0 0.0
      %587 = vmatprep.mubr.f32.mxu0 0.0
      %588 = vmatmul.mubr.f32.gmra.mxu0 %v341
      %v589 = vpop.f32.mrf.mxu0
      %v590 = vadd.f32 %v485, %v589
      %v591 = vpop.f32.mrf.mxu0
      %592 = vmatprep.mubr.f32.mxu0 0.0
      %593 = vmatmul.mubr.f32.gmra.mxu0 %v344
      %v594 = vpop.f32.mrf.mxu0
      %v595 = vadd.f32 %v490, %v594
      %v596 = vpop.f32.mrf.mxu0
      %597 = vmatprep.mubr.f32.mxu0 0.0
      %598 = vmatmul.mubr.f32.gmra.mxu0 %v347
      %v599 = vpop.f32.mrf.mxu0
      %v600 = vadd.f32 %v495, %v599
      %v601 = vpop.f32.mrf.mxu0
      %602 = vmatprep.mubr.f32.mxu0 0.0
      %603 = vmatmul.mubr.f32.gmra.mxu0 %v350
      %v604 = vpop.f32.mrf.mxu0
      %v605 = vadd.f32 %v500, %v604
      %v606 = vpop.f32.mrf.mxu0
      %607 = vmatprep.mubr.f32.mxu0 0.0
      %608 = vmatmul.mubr.f32.gmra.mxu0 %v353
      %v609 = vpop.f32.mrf.mxu0
      %v610 = vadd.f32 %v505, %v609
      %v611 = vpop.f32.mrf.mxu0
      %612 = vmatprep.mubr.f32.mxu0 0.0
      %613 = vmatmul.mubr.f32.gmra.mxu0 %v356
      %v614 = vpop.f32.mrf.mxu0
      %v615 = vadd.f32 %v510, %v614
      %v616 = vpop.f32.mrf.mxu0
      %617 = vmatprep.mubr.f32.mxu0 0.0
      %618 = vmatmul.mubr.f32.gmra.mxu0 %v359
      %v619 = vpop.f32.mrf.mxu0
      %v620 = vadd.f32 %v515, %v619
      %v621 = vpop.f32.mrf.mxu0
      %622 = vmatprep.mubr.f32.mxu0 0.0
      %623 = vmatmul.mubr.f32.gmra.mxu0 %v362
      %v624 = vpop.f32.mrf.mxu0
      %v625 = vadd.f32 %v520, %v624
      %v626 = vpop.f32.mrf.mxu0
      %627 = vdwg.mxu0
      %v628 = vmax.f32 %v590, 0.0
      %v629 = vmax.f32 %v595, 0.0
      %v630 = vmax.f32 %v600, 0.0
      %v631 = vmax.f32 %v605, 0.0
      %v632 = vmax.f32 %v610, 0.0
      %v633 = vmax.f32 %v615, 0.0
      %v634 = vmax.f32 %v620, 0.0
      %v635 = vmax.f32 %v625, 0.0
      %v636 = vld [vmem:[%s3] sm:$0xff]
      %v637 = vld [vmem:[%s3 + $0x8] sm:$0xff]
      %v638 = vld [vmem:[%s3 + $0x10] sm:$0xff]
      %v639 = vld [vmem:[%s3 + $0x18] sm:$0xff]
      %v640 = vld [vmem:[%s3 + $0x20] sm:$0xff]
      %v641 = vld [vmem:[%s3 + $0x28] sm:$0xff]
      %v642 = vld [vmem:[%s3 + $0x30] sm:$0xff]
      %v643 = vld [vmem:[%s3 + $0x38] sm:$0xff]
      %v644 = vld [vmem:[%s3 + $0x40] sm:$0xff]
      %v645 = vld [vmem:[%s3 + $0x48] sm:$0xff]
      %v646 = vld [vmem:[%s3 + $0x50] sm:$0xff]
      %v647 = vld [vmem:[%s3 + $0x58] sm:$0xff]
      %v648 = vld [vmem:[%s3 + $0x60] sm:$0xff]
      %v649 = vld [vmem:[%s3 + $0x68] sm:$0xff]
      %v650 = vld [vmem:[%s3 + $0x70] sm:$0xff]
      %v651 = vld [vmem:[%s3 + $0x78] sm:$0xff]
      %v652 = vld [vmem:[%s4] sm:$0x1]
      %v654 = vlaneseq
      %v655 = vshrl.u32 %v654, 7
      %v656 = vsub.s32 0, %v655
      %v657 = vrot.slane %v652, %v656
      %659 = vmatprep.subr.mxu0 0.0
      %660 = vmatpush1.msra.mxu0 %v651
      %661 = vmatprep.subr.mxu0 0.0
      %662 = vmatpush1.msra.mxu0 %v650
      %663 = vmatprep.subr.mxu0 0.0
      %664 = vmatpush1.msra.mxu0 %v649
      %665 = vmatprep.subr.mxu0 0.0
      %666 = vmatpush1.msra.mxu0 %v648
      %667 = vmatprep.subr.mxu0 0.0
      %668 = vmatpush1.msra.mxu0 %v647
      %669 = vmatprep.subr.mxu0 0.0
      %670 = vmatpush1.msra.mxu0 %v646
      %671 = vmatprep.subr.mxu0 0.0
      %672 = vmatpush1.msra.mxu0 %v645
      %673 = vmatprep.subr.mxu0 0.0
      %674 = vmatpush1.msra.mxu0 %v644
      %675 = vmatprep.subr.mxu0 0.0
      %676 = vmatpush1.msra.mxu0 %v643
      %677 = vmatprep.subr.mxu0 0.0
      %678 = vmatpush1.msra.mxu0 %v642
      %679 = vmatprep.subr.mxu0 0.0
      %680 = vmatpush1.msra.mxu0 %v641
      %681 = vmatprep.subr.mxu0 0.0
      %682 = vmatpush1.msra.mxu0 %v640
      %683 = vmatprep.subr.mxu0 0.0
      %684 = vmatpush1.msra.mxu0 %v639
      %685 = vmatprep.subr.mxu0 0.0
      %686 = vmatpush1.msra.mxu0 %v638
      %687 = vmatprep.subr.mxu0 0.0
      %688 = vmatpush1.msra.mxu0 %v637
      %689 = vmatprep.subr.mxu0 0.0
      %690 = vmatpush1.msra.mxu0 %v636
      %691 = vmatprep.subr.mxu0 0.0
      %692 = vmatpush2.msra.mxu0 0.0
      %693 = vmatprep.subr.mxu0 0.0
      %694 = vmatpush2.msra.mxu0 0.0
      %695 = vmatprep.subr.mxu0 0.0
      %696 = vmatpush2.msra.mxu0 0.0
      %697 = vmatprep.subr.mxu0 0.0
      %698 = vmatpush2.msra.mxu0 0.0
      %699 = vmatprep.subr.mxu0 0.0
      %700 = vmatpush2.msra.mxu0 0.0
      %701 = vmatprep.subr.mxu0 0.0
      %702 = vmatpush2.msra.mxu0 0.0
      %703 = vmatprep.subr.mxu0 0.0
      %704 = vmatpush2.msra.mxu0 0.0
      %705 = vmatprep.subr.mxu0 0.0
      %706 = vmatpush2.msra.mxu0 0.0
      %707 = vmatprep.subr.mxu0 0.0
      %708 = vmatpush2.msra.mxu0 0.0
      %709 = vmatprep.subr.mxu0 0.0
      %710 = vmatpush2.msra.mxu0 0.0
      %711 = vmatprep.subr.mxu0 0.0
      %712 = vmatpush2.msra.mxu0 0.0
      %713 = vmatprep.subr.mxu0 0.0
      %714 = vmatpush2.msra.mxu0 0.0
      %715 = vmatprep.subr.mxu0 0.0
      %716 = vmatpush2.msra.mxu0 0.0
      %717 = vmatprep.subr.mxu0 0.0
      %718 = vmatpush2.msra.mxu0 0.0
      %719 = vmatprep.subr.mxu0 0.0
      %720 = vmatpush2.msra.mxu0 0.0
      %721 = vmatprep.subr.mxu0 0.0
      %722 = vmatpush2.msra.mxu0 0.0
      %723 = vmatprep.mubr.f32.mxu0 0.0
      %724 = vmatmul.mubr.f32.gmra.mxu0 %v628
      %v725 = vpop.f32.mrf.mxu0
      %v726 = vadd.f32 %v657, %v725
      %v727 = vpop.f32.mrf.mxu0
      %728 = vmatprep.mubr.f32.mxu0 0.0
      %729 = vmatmul.mubr.f32.gmra.mxu0 %v629
      %v730 = vpop.f32.mrf.mxu0
      %v731 = vadd.f32 %v657, %v730
      %v732 = vpop.f32.mrf.mxu0
      %733 = vmatprep.mubr.f32.mxu0 0.0
      %734 = vmatmul.mubr.f32.gmra.mxu0 %v630
      %v735 = vpop.f32.mrf.mxu0
      %v736 = vadd.f32 %v657, %v735
      %v737 = vpop.f32.mrf.mxu0
      %738 = vmatprep.mubr.f32.mxu0 0.0
      %739 = vmatmul.mubr.f32.gmra.mxu0 %v631
      %v740 = vpop.f32.mrf.mxu0
      %v741 = vadd.f32 %v657, %v740
      %v742 = vpop.f32.mrf.mxu0
      %743 = vmatprep.mubr.f32.mxu0 0.0
      %744 = vmatmul.mubr.f32.gmra.mxu0 %v632
      %v745 = vpop.f32.mrf.mxu0
      %v746 = vadd.f32 %v657, %v745
      %v747 = vpop.f32.mrf.mxu0
      %748 = vmatprep.mubr.f32.mxu0 0.0
      %749 = vmatmul.mubr.f32.gmra.mxu0 %v633
      %v750 = vpop.f32.mrf.mxu0
      %v751 = vadd.f32 %v657, %v750
      %v752 = vpop.f32.mrf.mxu0
      %753 = vmatprep.mubr.f32.mxu0 0.0
      %754 = vmatmul.mubr.f32.gmra.mxu0 %v634
      %v755 = vpop.f32.mrf.mxu0
      %v756 = vadd.f32 %v657, %v755
      %v757 = vpop.f32.mrf.mxu0
      %758 = vmatprep.mubr.f32.mxu0 0.0
      %759 = vmatmul.mubr.f32.gmra.mxu0 %v635
      %v760 = vpop.f32.mrf.mxu0
      %v761 = vadd.f32 %v657, %v760
      %v762 = vpop.f32.mrf.mxu0
      %763 = vdwg.mxu0
      %v764 = vmax.f32 %v726, 0.0
      %v765 = vmax.f32 %v731, 0.0
      %v766 = vmax.f32 %v736, 0.0
      %v767 = vmax.f32 %v741, 0.0
      %v768 = vmax.f32 %v746, 0.0
      %v769 = vmax.f32 %v751, 0.0
      %v770 = vmax.f32 %v756, 0.0
      %v771 = vmax.f32 %v761, 0.0
      %v772 = vld [vmem:[%s5] sm:$0xff]
      %v773 = vld [vmem:[%s5 + $0x8] sm:$0xff]
      %v774 = vld [vmem:[%s5 + $0x10] sm:$0xff]
      %v775 = vld [vmem:[%s5 + $0x18] sm:$0xff]
      %v776 = vld [vmem:[%s5 + $0x20] sm:$0xff]
      %v777 = vld [vmem:[%s5 + $0x28] sm:$0xff]
      %v778 = vld [vmem:[%s5 + $0x30] sm:$0xff]
      %v779 = vld [vmem:[%s5 + $0x38] sm:$0xff]
      %v780 = vld [vmem:[%s5 + $0x40] sm:$0xff]
      %v781 = vld [vmem:[%s5 + $0x48] sm:$0xff]
      %v782 = vld [vmem:[%s5 + $0x50] sm:$0xff]
      %v783 = vld [vmem:[%s5 + $0x58] sm:$0xff]
      %v784 = vld [vmem:[%s5 + $0x60] sm:$0xff]
      %v785 = vld [vmem:[%s5 + $0x68] sm:$0xff]
      %v786 = vld [vmem:[%s5 + $0x70] sm:$0xff]
      %v787 = vld [vmem:[%s5 + $0x78] sm:$0xff]
      %v788 = vld [vmem:[%s6] sm:$0x1]
      %v790 = vlaneseq
      %v791 = vshrl.u32 %v790, 7
      %v792 = vsub.s32 0, %v791
      %v793 = vrot.slane %v788, %v792
      %795 = vmatprep.subr.mxu0 0.0
      %796 = vmatpush1.msra.mxu0 %v787
      %797 = vmatprep.subr.mxu0 0.0
      %798 = vmatpush1.msra.mxu0 %v786
      %799 = vmatprep.subr.mxu0 0.0
      %800 = vmatpush1.msra.mxu0 %v785
      %801 = vmatprep.subr.mxu0 0.0
      %802 = vmatpush1.msra.mxu0 %v784
      %803 = vmatprep.subr.mxu0 0.0
      %804 = vmatpush1.msra.mxu0 %v783
      %805 = vmatprep.subr.mxu0 0.0
      %806 = vmatpush1.msra.mxu0 %v782
      %807 = vmatprep.subr.mxu0 0.0
      %808 = vmatpush1.msra.mxu0 %v781
      %809 = vmatprep.subr.mxu0 0.0
      %810 = vmatpush1.msra.mxu0 %v780
      %811 = vmatprep.subr.mxu0 0.0
      %812 = vmatpush1.msra.mxu0 %v779
      %813 = vmatprep.subr.mxu0 0.0
      %814 = vmatpush1.msra.mxu0 %v778
      %815 = vmatprep.subr.mxu0 0.0
      %816 = vmatpush1.msra.mxu0 %v777
      %817 = vmatprep.subr.mxu0 0.0
      %818 = vmatpush1.msra.mxu0 %v776
      %819 = vmatprep.subr.mxu0 0.0
      %820 = vmatpush1.msra.mxu0 %v775
      %821 = vmatprep.subr.mxu0 0.0
      %822 = vmatpush1.msra.mxu0 %v774
      %823 = vmatprep.subr.mxu0 0.0
      %824 = vmatpush1.msra.mxu0 %v773
      %825 = vmatprep.subr.mxu0 0.0
      %826 = vmatpush1.msra.mxu0 %v772
      %827 = vmatprep.subr.mxu0 0.0
      %828 = vmatpush2.msra.mxu0 0.0
      %829 = vmatprep.subr.mxu0 0.0
      %830 = vmatpush2.msra.mxu0 0.0
      %831 = vmatprep.subr.mxu0 0.0
      %832 = vmatpush2.msra.mxu0 0.0
      %833 = vmatprep.subr.mxu0 0.0
      %834 = vmatpush2.msra.mxu0 0.0
      %835 = vmatprep.subr.mxu0 0.0
      %836 = vmatpush2.msra.mxu0 0.0
      %837 = vmatprep.subr.mxu0 0.0
      %838 = vmatpush2.msra.mxu0 0.0
      %839 = vmatprep.subr.mxu0 0.0
      %840 = vmatpush2.msra.mxu0 0.0
      %841 = vmatprep.subr.mxu0 0.0
      %842 = vmatpush2.msra.mxu0 0.0
      %843 = vmatprep.subr.mxu0 0.0
      %844 = vmatpush2.msra.mxu0 0.0
      %845 = vmatprep.subr.mxu0 0.0
      %846 = vmatpush2.msra.mxu0 0.0
      %847 = vmatprep.subr.mxu0 0.0
      %848 = vmatpush2.msra.mxu0 0.0
      %849 = vmatprep.subr.mxu0 0.0
      %850 = vmatpush2.msra.mxu0 0.0
      %851 = vmatprep.subr.mxu0 0.0
      %852 = vmatpush2.msra.mxu0 0.0
      %853 = vmatprep.subr.mxu0 0.0
      %854 = vmatpush2.msra.mxu0 0.0
      %855 = vmatprep.subr.mxu0 0.0
      %856 = vmatpush2.msra.mxu0 0.0
      %857 = vmatprep.subr.mxu0 0.0
      %858 = vmatpush2.msra.mxu0 0.0
      %859 = vmatprep.mubr.f32.mxu0 0.0
      %860 = vmatmul.mubr.f32.gmra.mxu0 %v764
      %v861 = vpop.f32.mrf.mxu0
      %v862 = vadd.f32 %v793, %v861
      %v863 = vpop.f32.mrf.mxu0
      %864 = vmatprep.mubr.f32.mxu0 0.0
      %865 = vmatmul.mubr.f32.gmra.mxu0 %v765
      %v866 = vpop.f32.mrf.mxu0
      %v867 = vadd.f32 %v793, %v866
      %v868 = vpop.f32.mrf.mxu0
      %869 = vmatprep.mubr.f32.mxu0 0.0
      %870 = vmatmul.mubr.f32.gmra.mxu0 %v766
      %v871 = vpop.f32.mrf.mxu0
      %v872 = vadd.f32 %v793, %v871
      %v873 = vpop.f32.mrf.mxu0
      %874 = vmatprep.mubr.f32.mxu0 0.0
      %875 = vmatmul.mubr.f32.gmra.mxu0 %v767
      %v876 = vpop.f32.mrf.mxu0
      %v877 = vadd.f32 %v793, %v876
      %v878 = vpop.f32.mrf.mxu0
      %879 = vmatprep.mubr.f32.mxu0 0.0
      %880 = vmatmul.mubr.f32.gmra.mxu0 %v768
      %v881 = vpop.f32.mrf.mxu0
      %v882 = vadd.f32 %v793, %v881
      %v883 = vpop.f32.mrf.mxu0
      %884 = vmatprep.mubr.f32.mxu0 0.0
      %885 = vmatmul.mubr.f32.gmra.mxu0 %v769
      %v886 = vpop.f32.mrf.mxu0
      %v887 = vadd.f32 %v793, %v886
      %v888 = vpop.f32.mrf.mxu0
      %889 = vmatprep.mubr.f32.mxu0 0.0
      %890 = vmatmul.mubr.f32.gmra.mxu0 %v770
      %v891 = vpop.f32.mrf.mxu0
      %v892 = vadd.f32 %v793, %v891
      %v893 = vpop.f32.mrf.mxu0
      %894 = vmatprep.mubr.f32.mxu0 0.0
      %895 = vmatmul.mubr.f32.gmra.mxu0 %v771
      %v896 = vpop.f32.mrf.mxu0
      %v897 = vadd.f32 %v793, %v896
      %v898 = vpop.f32.mrf.mxu0
      %899 = vdwg.mxu0
      %v900 = vmax.f32 %v862, 0.0
      %v901 = vmax.f32 %v867, 0.0
      %v902 = vmax.f32 %v872, 0.0
      %v903 = vmax.f32 %v877, 0.0
      %v904 = vmax.f32 %v882, 0.0
      %v905 = vmax.f32 %v887, 0.0
      %v906 = vmax.f32 %v892, 0.0
      %v907 = vmax.f32 %v897, 0.0
      %v908 = vld [vmem:[%s7] sm:$0xff]
      %v909 = vld [vmem:[%s7 + $0x8] sm:$0xff]
      %v910 = vld [vmem:[%s7 + $0x10] sm:$0xff]
      %v911 = vld [vmem:[%s7 + $0x18] sm:$0xff]
      %v912 = vld [vmem:[%s7 + $0x20] sm:$0xff]
      %v913 = vld [vmem:[%s7 + $0x28] sm:$0xff]
      %v914 = vld [vmem:[%s7 + $0x30] sm:$0xff]
      %v915 = vld [vmem:[%s7 + $0x38] sm:$0xff]
      %v916 = vld [vmem:[%s7 + $0x40] sm:$0xff]
      %v917 = vld [vmem:[%s7 + $0x48] sm:$0xff]
      %v918 = vld [vmem:[%s7 + $0x50] sm:$0xff]
      %v919 = vld [vmem:[%s7 + $0x58] sm:$0xff]
      %v920 = vld [vmem:[%s7 + $0x60] sm:$0xff]
      %v921 = vld [vmem:[%s7 + $0x68] sm:$0xff]
      %v922 = vld [vmem:[%s7 + $0x70] sm:$0xff]
      %v923 = vld [vmem:[%s7 + $0x78] sm:$0xff]
      %v924 = vld [vmem:[%s8] sm:$0x1]
      %v926 = vlaneseq
      %v927 = vshrl.u32 %v926, 7
      %v928 = vsub.s32 0, %v927
      %v929 = vrot.slane %v924, %v928
      %931 = vmatprep.subr.mxu0 0.0
      %932 = vmatpush1.msra.mxu0 %v923
      %933 = vmatprep.subr.mxu0 0.0
      %934 = vmatpush1.msra.mxu0 %v922
      %935 = vmatprep.subr.mxu0 0.0
      %936 = vmatpush1.msra.mxu0 %v921
      %937 = vmatprep.subr.mxu0 0.0
      %938 = vmatpush1.msra.mxu0 %v920
      %939 = vmatprep.subr.mxu0 0.0
      %940 = vmatpush1.msra.mxu0 %v919
      %941 = vmatprep.subr.mxu0 0.0
      %942 = vmatpush1.msra.mxu0 %v918
      %943 = vmatprep.subr.mxu0 0.0
      %944 = vmatpush1.msra.mxu0 %v917
      %945 = vmatprep.subr.mxu0 0.0
      %946 = vmatpush1.msra.mxu0 %v916
      %947 = vmatprep.subr.mxu0 0.0
      %948 = vmatpush1.msra.mxu0 %v915
      %949 = vmatprep.subr.mxu0 0.0
      %950 = vmatpush1.msra.mxu0 %v914
      %951 = vmatprep.subr.mxu0 0.0
      %952 = vmatpush1.msra.mxu0 %v913
      %953 = vmatprep.subr.mxu0 0.0
      %954 = vmatpush1.msra.mxu0 %v912
      %955 = vmatprep.subr.mxu0 0.0
      %956 = vmatpush1.msra.mxu0 %v911
      %957 = vmatprep.subr.mxu0 0.0
      %958 = vmatpush1.msra.mxu0 %v910
      %959 = vmatprep.subr.mxu0 0.0
      %960 = vmatpush1.msra.mxu0 %v909
      %961 = vmatprep.subr.mxu0 0.0
      %962 = vmatpush1.msra.mxu0 %v908
      %963 = vmatprep.subr.mxu0 0.0
      %964 = vmatpush2.msra.mxu0 0.0
      %965 = vmatprep.subr.mxu0 0.0
      %966 = vmatpush2.msra.mxu0 0.0
      %967 = vmatprep.subr.mxu0 0.0
      %968 = vmatpush2.msra.mxu0 0.0
      %969 = vmatprep.subr.mxu0 0.0
      %970 = vmatpush2.msra.mxu0 0.0
      %971 = vmatprep.subr.mxu0 0.0
      %972 = vmatpush2.msra.mxu0 0.0
      %973 = vmatprep.subr.mxu0 0.0
      %974 = vmatpush2.msra.mxu0 0.0
      %975 = vmatprep.subr.mxu0 0.0
      %976 = vmatpush2.msra.mxu0 0.0
      %977 = vmatprep.subr.mxu0 0.0
      %978 = vmatpush2.msra.mxu0 0.0
      %979 = vmatprep.subr.mxu0 0.0
      %980 = vmatpush2.msra.mxu0 0.0
      %981 = vmatprep.subr.mxu0 0.0
      %982 = vmatpush2.msra.mxu0 0.0
      %983 = vmatprep.subr.mxu0 0.0
      %984 = vmatpush2.msra.mxu0 0.0
      %985 = vmatprep.subr.mxu0 0.0
      %986 = vmatpush2.msra.mxu0 0.0
      %987 = vmatprep.subr.mxu0 0.0
      %988 = vmatpush2.msra.mxu0 0.0
      %989 = vmatprep.subr.mxu0 0.0
      %990 = vmatpush2.msra.mxu0 0.0
      %991 = vmatprep.subr.mxu0 0.0
      %992 = vmatpush2.msra.mxu0 0.0
      %993 = vmatprep.subr.mxu0 0.0
      %994 = vmatpush2.msra.mxu0 0.0
      %995 = vmatprep.mubr.f32.mxu0 0.0
      %996 = vmatmul.mubr.f32.gmra.mxu0 %v900
      %v997 = vpop.f32.mrf.mxu0
      %v998 = vadd.f32 %v929, %v997
      %v999 = vpop.f32.mrf.mxu0
      %1000 = vmatprep.mubr.f32.mxu0 0.0
      %1001 = vmatmul.mubr.f32.gmra.mxu0 %v901
      %v1002 = vpop.f32.mrf.mxu0
      %v1003 = vadd.f32 %v929, %v1002
      %v1004 = vpop.f32.mrf.mxu0
      %1005 = vmatprep.mubr.f32.mxu0 0.0
      %1006 = vmatmul.mubr.f32.gmra.mxu0 %v902
      %v1007 = vpop.f32.mrf.mxu0
      %v1008 = vadd.f32 %v929, %v1007
      %v1009 = vpop.f32.mrf.mxu0
      %1010 = vmatprep.mubr.f32.mxu0 0.0
      %1011 = vmatmul.mubr.f32.gmra.mxu0 %v903
      %v1012 = vpop.f32.mrf.mxu0
      %v1013 = vadd.f32 %v929, %v1012
      %v1014 = vpop.f32.mrf.mxu0
      %1015 = vmatprep.mubr.f32.mxu0 0.0
      %1016 = vmatmul.mubr.f32.gmra.mxu0 %v904
      %v1017 = vpop.f32.mrf.mxu0
      %v1018 = vadd.f32 %v929, %v1017
      %v1019 = vpop.f32.mrf.mxu0
      %1020 = vmatprep.mubr.f32.mxu0 0.0
      %1021 = vmatmul.mubr.f32.gmra.mxu0 %v905
      %v1022 = vpop.f32.mrf.mxu0
      %v1023 = vadd.f32 %v929, %v1022
      %v1024 = vpop.f32.mrf.mxu0
      %1025 = vmatprep.mubr.f32.mxu0 0.0
      %1026 = vmatmul.mubr.f32.gmra.mxu0 %v906
      %v1027 = vpop.f32.mrf.mxu0
      %v1028 = vadd.f32 %v929, %v1027
      %v1029 = vpop.f32.mrf.mxu0
      %1030 = vmatprep.mubr.f32.mxu0 0.0
      %1031 = vmatmul.mubr.f32.gmra.mxu0 %v907
      %v1032 = vpop.f32.mrf.mxu0
      %v1033 = vadd.f32 %v929, %v1032
      %v1034 = vpop.f32.mrf.mxu0
      %1035 = vdwg.mxu0
      %vm1036 = vcmask 261120
      %1037 = vst.msk [vmem:[%s337] sm:$0xff] %vm1036, %v998
      %1038 = vst.msk [vmem:[%s337 + $0x8] sm:$0xff] %vm1036, %v1003
      %1039 = vst.msk [vmem:[%s337 + $0x10] sm:$0xff] %vm1036, %v1008
      %1040 = vst.msk [vmem:[%s337 + $0x18] sm:$0xff] %vm1036, %v1013
      %1041 = vst.msk [vmem:[%s337 + $0x20] sm:$0xff] %vm1036, %v1018
      %1042 = vst.msk [vmem:[%s337 + $0x28] sm:$0xff] %vm1036, %v1023
      %1043 = vst.msk [vmem:[%s337 + $0x30] sm:$0xff] %vm1036, %v1028
      %1044 = vst.msk [vmem:[%s337 + $0x38] sm:$0xff] %vm1036, %v1033
      %s1045 = smul.u32 8, %s20
      %p1046 = scmp.lt.s32.totalorder %s1045, 15
      %s1047 = scalar_select %p1046, %s1045, 15
      %s1048 = smul.addr %s1047, 8
      %s1049 = scalar_lea.vmem %s9, %s1048
      // Predicated region
      $region57: #{classifier_forward.1} parent=55 // pred_check
        %p1050 = pneg %p232
      $region58: #{classifier_forward.1} parent=55 // pred_check_branch
        %1052 = sbr.rel (%p1050) target = $region60
      $region59: #{classifier_forward.1} parent=55 // pred_region
        %s1053 = smul.u32 8, %s20
      $region60: #{classifier_forward.1} parent=55 // pred_fallthru
        _
    $region56: #{classifier_forward.1} parent=5 // pred_fallthru
      _
    %p1054 = scmp.le.s32.totalorder 2, %s15
    // Predicated region
    $region61: #{classifier_forward.1} parent=5 // pred_check
      %p1055 = pneg %p1054
    $region62: #{classifier_forward.1} parent=5 // pred_check_branch
      %1057 = sbr.rel (%p1055) target = $region64
    $region63: #{classifier_forward.1} parent=5 // pred_region
      %s1058 = ssub.s32 %s15, 2
      // Predicated region
      $region65: #{classifier_forward.1} parent=63 // pred_check
        %p1059 = pneg %p238
      $region66: #{classifier_forward.1} parent=63 // pred_check_branch
        %1061 = sbr.rel (%p1059) target = $region68
      $region67: #{classifier_forward.1} parent=63 // pred_region
        %s1062 = smul.u32 8, %s21
        %p1063 = scmp.lt.s32.totalorder %s1062, 15
        %s1064 = scalar_select %p1063, %s1062, 15
        %s1065 = smul.addr %s1064, 8
        %s1066 = scalar_lea.vmem %s9, %s1065
      $region68: #{classifier_forward.1} parent=63 // pred_fallthru
        _
    $region64: #{classifier_forward.1} parent=5 // pred_fallthru
      _
  $region6: #{classifier_forward.1} parent=0 // loop_footer
    %s19 = sadd.s32 1, %s15
  $region7: #{classifier_forward.1} parent=0 // loop_footer_branch
    %14 = sbr.rel target = $region3
  $region8: #{classifier_forward.1} parent=0 // loop_exit
    _

</llo_original>
